<compile_context>
chip_gen: v7x
topology: tpu7x:2x2x1
jax: 0.10.0
libtpu: 0.0.40
codegen_flags: <defaults>
</compile_context>

<pallas_src>
import jax
import jax.numpy as jnp
from jax.experimental import pallas as pl
from jax.experimental.pallas import tpu as pltpu

_LANE = 128
_FUSED_BUDGET = 24 * 1024 * 1024     # per-step (in+out, double-buffered), v7x-safe
_COLLAPSE_BUDGET = 2 * 1024 * 1024   # below this, process the whole batch in 1 step
_MAX_COLLAPSE_B = 8


def _vmem_limit(footprint_bytes):
    # Explicit scoped-VMEM limit: footprint + headroom, clamped well below the
    # smallest physical VMEM (64 MiB on v7x).
    return int(min(56 << 20, max(16 << 20, footprint_bytes + (4 << 20))))


def _make_fused_kernel(bb, inv_hw):
    """Single-pass kernel: pool + channel MLP + rescale for `bb` batch rows."""

    def kernel(x_ref, w1t_ref, w2_ref, o_ref):
        # x_ref/o_ref: (bb, C, HWp); w1t_ref/w2_ref: (C, C_red)
        w1t = w1t_ref[...].astype(jnp.float32)
        w2 = w2_ref[...].astype(jnp.float32)
        for b in range(bb):  # bb is a small static constant (1, or B <= 8)
            # Global average pool: f32 accumulation over the lane axis; divide
            # by the true H*W (spatial zero-padding does not perturb the sum).
            pooled = jnp.sum(x_ref[b].astype(jnp.float32), axis=-1,
                             keepdims=True) * inv_hw                 # (C, 1)
            # 1x1 conv C -> C_red + ReLU (VPU multiply + sublane reduction).
            hidden = jnp.maximum(
                jnp.sum(pooled * w1t, axis=0, keepdims=True), 0.0)   # (1, C_red)
            # 1x1 conv C_red -> C + Sigmoid (exp on the EUP).
            logits = jnp.sum(hidden * w2, axis=-1, keepdims=True)    # (C, 1)
            scale = 1.0 / (1.0 + jnp.exp(-logits))                   # (C, 1)
            # Rescale directly from the native-dtype slab; only the tiny
            # (C, 1) scale is cast, never the slab.
            o_ref[b] = x_ref[b] * scale.astype(o_ref.dtype)

    return kernel


def _make_pool_attn_kernel(inv_hw):
    """Two-pass, pass 1: accumulate per-channel sums over HW tiles, emit scale."""

    def kernel(x_ref, w1t_ref, w2_ref, scale_ref, acc_ref):
        # grid = (B, HW_tiles); x_ref: (1, C, T); scale_ref: (1, C, 1)
        t = pl.program_id(1)

        @pl.when(t == 0)
        def _():
            acc_ref[...] = jnp.zeros_like(acc_ref)

        acc_ref[...] += jnp.sum(x_ref[0].astype(jnp.float32), axis=-1,
                                keepdims=True)                        # (C, 1)

        @pl.when(t == pl.num_programs(1) - 1)
        def _():
            pooled = acc_ref[...] * inv_hw                            # (C, 1)
            w1t = w1t_ref[...].astype(jnp.float32)
            w2 = w2_ref[...].astype(jnp.float32)
            hidden = jnp.maximum(
                jnp.sum(pooled * w1t, axis=0, keepdims=True), 0.0)    # (1, C_red)
            logits = jnp.sum(hidden * w2, axis=-1, keepdims=True)     # (C, 1)
            scale = 1.0 / (1.0 + jnp.exp(-logits))
            scale_ref[0] = scale.astype(scale_ref.dtype)

    return kernel


def _rescale_kernel(x_ref, scale_ref, o_ref):
    """Two-pass, pass 2: tiled, lane-dense per-channel rescale."""
    # x_ref/o_ref: (1, C, T); scale_ref: (1, C, 1) broadcasts over lanes.
    o_ref[...] = x_ref[...] * scale_ref[...].astype(o_ref.dtype)


def ca_layer(x, w1, w2, *, force_two_pass=False, max_tile_hw=None):
    """CALayer forward.

    x : (B, C, H, W)
    w1: (C_red, C)  -- conv_du[0].weight[:, :, 0, 0]  (bias=False)
    w2: (C, C_red)  -- conv_du[2].weight[:, :, 0, 0]  (bias=False)
    returns (B, C, H, W)
    """
    B, C, H, W = x.shape
    C_red = w1.shape[0]
    assert w1.shape == (C_red, C) and w2.shape == (C, C_red)
    HW = H * W
    dtype_bytes = jnp.dtype(x.dtype).itemsize
    inv_hw = float(1.0 / HW)

    w1t = w1.T  # (C, C_red); tiny

    hw_pad = pl.cdiv(HW, _LANE) * _LANE          # lane-dense spatial extent
    slab_bytes = C * hw_pad * dtype_bytes        # one (C, HW) slab, native dtype
    step_bytes = 4 * slab_bytes                  # in + out, double-buffered
    weight_bytes = 2 * C * C_red * 4

    use_fused = (not force_two_pass) and (step_bytes <= _FUSED_BUDGET)

    if use_fused:
        # Collapse the grid for tiny, launch-overhead-dominated problems.
        if B <= _MAX_COLLAPSE_B and B * step_bytes <= _COLLAPSE_BUDGET:
            bb = B
        else:
            bb = 1
        hw_total = hw_pad
    else:
        # Two-pass fallback: largest lane tile whose rescale step (in + out,
        # double-buffered) still fits the VMEM budget.
        t_hw = max(_LANE,
                   (_FUSED_BUDGET // (4 * C * dtype_bytes)) // _LANE * _LANE)
        if max_tile_hw is not None:
            t_hw = min(t_hw, max(_LANE, (max_tile_hw // _LANE) * _LANE))
        t_hw = min(t_hw, hw_pad)
        n_tiles = pl.cdiv(hw_pad, t_hw)
        hw_total = n_tiles * t_hw

    x_flat = x.reshape(B, C, HW)                 # contiguous reshape: free
    if hw_total != HW:
        # Zero padding keeps the pooled sum exact (we divide by the true HW)
        # and padded outputs are sliced off below.
        x_flat = jnp.pad(x_flat, ((0, 0), (0, 0), (0, hw_total - HW)))

    if use_fused:
        cost = pl.CostEstimate(
            flops=2 * B * C * HW + 4 * B * C * C_red,
            transcendentals=B * C,
            bytes_accessed=2 * B * C * HW * dtype_bytes + weight_bytes,
        )
        out = pl.pallas_call(
            _make_fused_kernel(bb, inv_hw),
            out_shape=jax.ShapeDtypeStruct((B, C, hw_total), x.dtype),
            grid=(B // bb,),
            in_specs=[
                pl.BlockSpec((bb, C, hw_total), lambda i: (i, 0, 0)),
                pl.BlockSpec((C, C_red), lambda i: (0, 0)),
                pl.BlockSpec((C, C_red), lambda i: (0, 0)),
            ],
            out_specs=pl.BlockSpec((bb, C, hw_total), lambda i: (i, 0, 0)),
            compiler_params=pltpu.CompilerParams(
                dimension_semantics=("parallel",),
                vmem_limit_bytes=_vmem_limit(bb * step_bytes + weight_bytes),
            ),
            cost_estimate=cost,
        )(x_flat, w1t, w2)
    else:
        # ---- Pass 1: pooled sums + channel MLP -> per-(batch, channel) scale.
        cost1 = pl.CostEstimate(
            flops=B * C * HW + 4 * B * C * C_red,
            transcendentals=B * C,
            bytes_accessed=B * C * HW * dtype_bytes + weight_bytes,
        )
        scale = pl.pallas_call(
            _make_pool_attn_kernel(inv_hw),
            out_shape=jax.ShapeDtypeStruct((B, C, 1), x.dtype),
            grid=(B, n_tiles),
            in_specs=[
                pl.BlockSpec((1, C, t_hw), lambda b, t: (b, 0, t)),
                pl.BlockSpec((C, C_red), lambda b, t: (0, 0)),
                pl.BlockSpec((C, C_red), lambda b, t: (0, 0)),
            ],
            out_specs=pl.BlockSpec((1, C, 1), lambda b, t: (b, 0, 0)),
            scratch_shapes=[pltpu.VMEM((C, 1), jnp.float32)],
            compiler_params=pltpu.CompilerParams(
                dimension_semantics=("parallel", "arbitrary"),
                vmem_limit_bytes=_vmem_limit(
                    2 * C * t_hw * dtype_bytes + weight_bytes),
            ),
            cost_estimate=cost1,
        )(x_flat, w1t, w2)

        # ---- Pass 2: tiled, lane-dense per-channel rescale (both axes parallel).
        cost2 = pl.CostEstimate(
            flops=B * C * HW,
            transcendentals=0,
            bytes_accessed=2 * B * C * HW * dtype_bytes,
        )
        out = pl.pallas_call(
            _rescale_kernel,
            out_shape=jax.ShapeDtypeStruct((B, C, hw_total), x.dtype),
            grid=(B, n_tiles),
            in_specs=[
                pl.BlockSpec((1, C, t_hw), lambda b, t: (b, 0, t)),
                pl.BlockSpec((1, C, 1), lambda b, t: (b, 0, 0)),
            ],
            out_specs=pl.BlockSpec((1, C, t_hw), lambda b, t: (b, 0, t)),
            compiler_params=pltpu.CompilerParams(
                dimension_semantics=("parallel", "parallel"),
                vmem_limit_bytes=_vmem_limit(4 * C * t_hw * dtype_bytes),
            ),
            cost_estimate=cost2,
        )(x_flat, scale)

    if hw_total != HW:
        out = out[:, :, :HW]
    return out.reshape(B, C, H, W)


def ca_layer_ref(x, w1, w2):
    """Pure-JAX reference mirroring the PyTorch CALayer (bias=False)."""
    y = jnp.mean(x, axis=(2, 3), keepdims=True)            # avg_pool -> (B,C,1,1)
    y = jnp.einsum("rc,bcij->brij", w1, y)                  # 1x1 conv, no bias
    y = jnp.maximum(y, 0.0)                                 # ReLU
    y = jnp.einsum("cr,brij->bcij", w2, y)                  # 1x1 conv, no bias
    y = jax.nn.sigmoid(y)                                   # Sigmoid
    return x * y


if __name__ == "__main__":
    B, C, H, W = 2, 32, 16, 16
    reduction = 16
    C_red = C // reduction

    key = jax.random.PRNGKey(0)
    kx, k1, k2 = jax.random.split(key, 3)
    x = jax.random.normal(kx, (B, C, H, W), dtype=jnp.float32)
    w1 = jax.random.normal(k1, (C_red, C), dtype=jnp.float32) * 0.1
    w2 = jax.random.normal(k2, (C, C_red), dtype=jnp.float32) * 0.1

    ref = ca_layer_ref(x, w1, w2)

    # Fused single-pass path (HW multiple of 128; grid collapsed for tiny batch).
    out = jax.block_until_ready(ca_layer(x, w1, w2))
    assert out.shape == ref.shape == (B, C, H, W), out.shape
    assert jnp.allclose(out, ref, atol=1e-5, rtol=1e-5)

    # Two-pass fallback forced with a small spatial tile to exercise the
    # accumulator across HW tiles and the (B, HW_tiles) parallel rescale.
    out2 = jax.block_until_ready(
        ca_layer(x, w1, w2, force_two_pass=True, max_tile_hw=128))
    assert jnp.allclose(out2, ref, atol=1e-5, rtol=1e-5)

    # Non-128-multiple spatial size: exercises the lane-padding path.
    Hb, Wb = 5, 7
    xb = jax.random.normal(kx, (B, C, Hb, Wb), dtype=jnp.float32)
    refb = ca_layer_ref(xb, w1, w2)
    outb = jax.block_until_ready(ca_layer(xb, w1, w2))
    assert jnp.allclose(outb, refb, atol=1e-5, rtol=1e-5)

    print("KERNEL_OK")
</pallas_src>

<mosaic_0001>
module attributes {stable_mosaic.version = 11 : i64} {
  func.func @kernel(%arg0: i32, %arg1: memref<2x32x256xf32, #tpu.memory_space<vmem>>, %arg2: memref<32x2xf32, #tpu.memory_space<vmem>>, %arg3: memref<32x2xf32, #tpu.memory_space<vmem>>, %arg4: memref<2x32x256xf32, #tpu.memory_space<vmem>>) attributes {dimension_semantics = [#tpu.dimension_semantics<parallel>], iteration_bounds = array<i64: 1>, scalar_prefetch = 0 : i64, scratch_operands = 0 : i64, tpu.core_type = #tpu.core_type<tc>, window_params = [{transform_indices = @transform_0, window_bounds = array<i64: 2, 32, 256>}, {pipeline_mode = #tpu.pipeline_mode<synchronous>, transform_indices = @transform_1, window_bounds = array<i64: 32, 2>}, {pipeline_mode = #tpu.pipeline_mode<synchronous>, transform_indices = @transform_2, window_bounds = array<i64: 32, 2>}, {transform_indices = @transform_3, window_bounds = array<i64: 2, 32, 256>}]} {
    %c0 = arith.constant 0 : index
    %c0_0 = arith.constant 0 : index
    %0 = vector.load %arg2[%c0, %c0_0] : memref<32x2xf32, #tpu.memory_space<vmem>>, vector<32x2xf32>
    %c0_1 = arith.constant 0 : index
    %c0_2 = arith.constant 0 : index
    %1 = vector.load %arg3[%c0_1, %c0_2] : memref<32x2xf32, #tpu.memory_space<vmem>>, vector<32x2xf32>
    %c0_3 = arith.constant 0 : index
    %c0_4 = arith.constant 0 : index
    %c0_5 = arith.constant 0 : index
    %2 = vector.load %arg1[%c0_3, %c0_4, %c0_5] : memref<2x32x256xf32, #tpu.memory_space<vmem>>, vector<1x32x256xf32>
    %3 = vector.shape_cast %2 : vector<1x32x256xf32> to vector<32x256xf32>
    %cst = arith.constant dense<0.000000e+00> : vector<32xf32>
    %4 = vector.multi_reduction <add>, %3, %cst [1] : vector<32x256xf32> to vector<32xf32>
    %5 = vector.shape_cast %4 : vector<32xf32> to vector<32x1xf32>
    %cst_6 = arith.constant 3.906250e-03 : f32
    %6 = vector.broadcast %cst_6 : f32 to vector<32x1xf32>
    %7 = arith.mulf %5, %6 : vector<32x1xf32>
    %8 = vector.broadcast %7 : vector<32x1xf32> to vector<32x2xf32>
    %9 = arith.mulf %8, %0 : vector<32x2xf32>
    %cst_7 = arith.constant dense<0.000000e+00> : vector<2xf32>
    %10 = vector.multi_reduction <add>, %9, %cst_7 [0] : vector<32x2xf32> to vector<2xf32>
    %11 = vector.shape_cast %10 : vector<2xf32> to vector<1x2xf32>
    %cst_8 = arith.constant 0.000000e+00 : f32
    %12 = vector.broadcast %cst_8 : f32 to vector<1x2xf32>
    %13 = arith.maximumf %11, %12 : vector<1x2xf32>
    %14 = vector.broadcast %13 : vector<1x2xf32> to vector<32x2xf32>
    %15 = arith.mulf %14, %1 : vector<32x2xf32>
    %cst_9 = arith.constant dense<0.000000e+00> : vector<32xf32>
    %16 = vector.multi_reduction <add>, %15, %cst_9 [1] : vector<32x2xf32> to vector<32xf32>
    %17 = vector.shape_cast %16 : vector<32xf32> to vector<32x1xf32>
    %cst_10 = arith.constant 0.000000e+00 : f32
    %18 = vector.broadcast %cst_10 : f32 to vector<32x1xf32>
    %19 = arith.subf %18, %17 : vector<32x1xf32>
    %20 = math.exp %19 : vector<32x1xf32>
    %cst_11 = arith.constant 1.000000e+00 : f32
    %21 = vector.broadcast %cst_11 : f32 to vector<32x1xf32>
    %22 = arith.addf %21, %20 : vector<32x1xf32>
    %cst_12 = arith.constant 1.000000e+00 : f32
    %23 = vector.broadcast %cst_12 : f32 to vector<32x1xf32>
    %24 = arith.divf %23, %22 : vector<32x1xf32>
    %c0_13 = arith.constant 0 : index
    %c0_14 = arith.constant 0 : index
    %c0_15 = arith.constant 0 : index
    %25 = vector.load %arg1[%c0_13, %c0_14, %c0_15] : memref<2x32x256xf32, #tpu.memory_space<vmem>>, vector<1x32x256xf32>
    %26 = vector.shape_cast %25 : vector<1x32x256xf32> to vector<32x256xf32>
    %27 = vector.broadcast %24 : vector<32x1xf32> to vector<32x256xf32>
    %28 = arith.mulf %26, %27 : vector<32x256xf32>
    %c0_16 = arith.constant 0 : index
    %c0_17 = arith.constant 0 : index
    %c0_18 = arith.constant 0 : index
    %29 = vector.load %arg4[%c0_16, %c0_17, %c0_18] : memref<2x32x256xf32, #tpu.memory_space<vmem>>, vector<1x32x256xf32>
    %30 = vector.shape_cast %29 : vector<1x32x256xf32> to vector<32x256xf32>
    %31 = vector.shape_cast %28 : vector<32x256xf32> to vector<1x32x256xf32>
    tpu.vector_store %arg4[%c0_16, %c0_17, %c0_18], %31 {strides = array<i32>} : memref<2x32x256xf32, #tpu.memory_space<vmem>>, vector<1x32x256xf32>,
    %c1 = arith.constant 1 : index
    %c0_19 = arith.constant 0 : index
    %c0_20 = arith.constant 0 : index
    %32 = vector.load %arg1[%c1, %c0_19, %c0_20] : memref<2x32x256xf32, #tpu.memory_space<vmem>>, vector<1x32x256xf32>
    %33 = vector.shape_cast %32 : vector<1x32x256xf32> to vector<32x256xf32>
    %cst_21 = arith.constant dense<0.000000e+00> : vector<32xf32>
    %34 = vector.multi_reduction <add>, %33, %cst_21 [1] : vector<32x256xf32> to vector<32xf32>
    %35 = vector.shape_cast %34 : vector<32xf32> to vector<32x1xf32>
    %cst_22 = arith.constant 3.906250e-03 : f32
    %36 = vector.broadcast %cst_22 : f32 to vector<32x1xf32>
    %37 = arith.mulf %35, %36 : vector<32x1xf32>
    %38 = vector.broadcast %37 : vector<32x1xf32> to vector<32x2xf32>
    %39 = arith.mulf %38, %0 : vector<32x2xf32>
    %cst_23 = arith.constant dense<0.000000e+00> : vector<2xf32>
    %40 = vector.multi_reduction <add>, %39, %cst_23 [0] : vector<32x2xf32> to vector<2xf32>
    %41 = vector.shape_cast %40 : vector<2xf32> to vector<1x2xf32>
    %cst_24 = arith.constant 0.000000e+00 : f32
    %42 = vector.broadcast %cst_24 : f32 to vector<1x2xf32>
    %43 = arith.maximumf %41, %42 : vector<1x2xf32>
    %44 = vector.broadcast %43 : vector<1x2xf32> to vector<32x2xf32>
    %45 = arith.mulf %44, %1 : vector<32x2xf32>
    %cst_25 = arith.constant dense<0.000000e+00> : vector<32xf32>
    %46 = vector.multi_reduction <add>, %45, %cst_25 [1] : vector<32x2xf32> to vector<32xf32>
    %47 = vector.shape_cast %46 : vector<32xf32> to vector<32x1xf32>
    %cst_26 = arith.constant 0.000000e+00 : f32
    %48 = vector.broadcast %cst_26 : f32 to vector<32x1xf32>
    %49 = arith.subf %48, %47 : vector<32x1xf32>
    %50 = math.exp %49 : vector<32x1xf32>
    %cst_27 = arith.constant 1.000000e+00 : f32
    %51 = vector.broadcast %cst_27 : f32 to vector<32x1xf32>
    %52 = arith.addf %51, %50 : vector<32x1xf32>
    %cst_28 = arith.constant 1.000000e+00 : f32
    %53 = vector.broadcast %cst_28 : f32 to vector<32x1xf32>
    %54 = arith.divf %53, %52 : vector<32x1xf32>
    %c1_29 = arith.constant 1 : index
    %c0_30 = arith.constant 0 : index
    %c0_31 = arith.constant 0 : index
    %55 = vector.load %arg1[%c1_29, %c0_30, %c0_31] : memref<2x32x256xf32, #tpu.memory_space<vmem>>, vector<1x32x256xf32>
    %56 = vector.shape_cast %55 : vector<1x32x256xf32> to vector<32x256xf32>
    %57 = vector.broadcast %54 : vector<32x1xf32> to vector<32x256xf32>
    %58 = arith.mulf %56, %57 : vector<32x256xf32>
    %c1_32 = arith.constant 1 : index
    %c0_33 = arith.constant 0 : index
    %c0_34 = arith.constant 0 : index
    %59 = vector.load %arg4[%c1_32, %c0_33, %c0_34] : memref<2x32x256xf32, #tpu.memory_space<vmem>>, vector<1x32x256xf32>
    %60 = vector.shape_cast %59 : vector<1x32x256xf32> to vector<32x256xf32>
    %61 = vector.shape_cast %58 : vector<32x256xf32> to vector<1x32x256xf32>
    tpu.vector_store %arg4[%c1_32, %c0_33, %c0_34], %61 {strides = array<i32>} : memref<2x32x256xf32, #tpu.memory_space<vmem>>, vector<1x32x256xf32>,
    return
  }
  func.func @transform_0(%arg0: i32) -> (i32, i32, i32) {
    %c0_i32 = arith.constant 0 : i32
    %c0_i32_0 = arith.constant 0 : i32
    %c0_i32_1 = arith.constant 0 : i32
    return %arg0, %c0_i32, %c0_i32_0 : i32, i32, i32
  }
  func.func @transform_1(%arg0: i32) -> (i32, i32) {
    %c0_i32 = arith.constant 0 : i32
    %c0_i32_0 = arith.constant 0 : i32
    %c0_i32_1 = arith.constant 0 : i32
    return %c0_i32, %c0_i32_0 : i32, i32
  }
  func.func @transform_2(%arg0: i32) -> (i32, i32) {
    %c0_i32 = arith.constant 0 : i32
    %c0_i32_0 = arith.constant 0 : i32
    %c0_i32_1 = arith.constant 0 : i32
    return %c0_i32, %c0_i32_0 : i32, i32
  }
  func.func @transform_3(%arg0: i32) -> (i32, i32, i32) {
    %c0_i32 = arith.constant 0 : i32
    %c0_i32_0 = arith.constant 0 : i32
    %c0_i32_1 = arith.constant 0 : i32
    return %arg0, %c0_i32, %c0_i32_0 : i32, i32, i32
  }
}

</mosaic_0001>

<llo_original>
// kernel: tpu_custom_call.1
$region0: #{tpu_custom_call.1}
  #allocation0 [shape = 'u32[]', space=smem, size = 0x4, offset = 0x4, fixed_abs, tag = 'smem constant byte address 0x4 - core index']
  #allocation1 [shape = 'u32[144,128]{1,0:T(1,128)}', space=vmem, size = 0x12000, scoped, tag = 'internal scratch']
  %s0 = inlined_call_operand.hbm [shape: f32[2,32,256], index: 0, kind: input, shape index: {}]
  %s1 = inlined_call_operand.vmem [shape: f32[32,2], index: 1, kind: input, shape index: {}]
  %s2 = inlined_call_operand.vmem [shape: f32[32,2], index: 2, kind: input, shape index: {}]
  %s3 = inlined_call_operand.hbm [shape: f32[2,32,256], index: 3, kind: output, shape index: {}]
  %s4 = sld [smem:[#allocation0]]
  $region26: #{tpu_custom_call.1} parent=0
    _
  %s6 = ssub.s32 1, %s4
  %s7 = scalar_select 0, %s6, %s4
  $region1: #{tpu_custom_call.1} parent=0
    #allocation2 [shape = 'u8[65536]{0}', space=vmem, size = 0x10000, scoped, tag = 'input window, operand 0, single buffered']
    #allocation3 [shape = 's32[1]{0}', space=sflag, size = 0x4, scoped, tag = 'scoped memory for tpu_custom_call.1']
    #allocation4 [shape = 's32[1]{0}', space=sflag, size = 0x4, scoped, tag = 'scoped memory for tpu_custom_call.1']
    #allocation5 [shape = 'u8[65536]{0}', space=vmem, size = 0x10000, scoped, tag = 'output window, operand 0, single buffered']
    %8 = vsyncpa [#allocation3], 0
    %9 = vsyncpa [#allocation4], 0
    // Predicated region
    $region2: #{tpu_custom_call.1} parent=1 // pred_check
      _
    $region3: #{tpu_custom_call.1} parent=1 // pred_check_branch
      %11 = sbr.rel (0) target = $region5
    $region4: #{tpu_custom_call.1} parent=1 // pred_region
      %s13 = ssub.s32 2048, 2048
      %14 = vsyncadd [#allocation3], %s13
      %s15 = sshll.u32 [#allocation2], 4
      %s16 = int_to_ptr.vmem [resolvable:$true] %s15
      %21 = dma.hbm_to_vmem [thread:$0]  %s0, 2048, %s16, [#allocation3], 256, 256, 16
    $region5: #{tpu_custom_call.1} parent=1 // pred_fallthru
      _
    // Predicated region
    $region6: #{tpu_custom_call.1} parent=1 // pred_check
      _
    $region7: #{tpu_custom_call.1} parent=1 // pred_check_branch
      %23 = sbr.rel (0) target = $region9
    $region8: #{tpu_custom_call.1} parent=1 // pred_region
      _
    $region9: #{tpu_custom_call.1} parent=1 // pred_fallthru
      _
    // Predicated region
    $region10: #{tpu_custom_call.1} parent=1 // pred_check
      _
    $region11: #{tpu_custom_call.1} parent=1 // pred_check_branch
      %25 = sbr.rel (0) target = $region13
    $region12: #{tpu_custom_call.1} parent=1 // pred_region
      _
    $region13: #{tpu_custom_call.1} parent=1 // pred_fallthru
      _
    // Predicated region
    $region14: #{tpu_custom_call.1} parent=1 // pred_check
      _
    $region15: #{tpu_custom_call.1} parent=1 // pred_check_branch
      %27 = sbr.rel (0) target = $region17
    $region16: #{tpu_custom_call.1} parent=1 // pred_region
      %28 = dma.done [#allocation3], 2048
    $region17: #{tpu_custom_call.1} parent=1 // pred_fallthru
      _
    %v29 = vld [vmem:[%s1] sm:$0xff]
    %v30 = vld [vmem:[%s1 + $0x8] sm:$0xff]
    %v31 = vld [vmem:[%s1 + $0x10] sm:$0xff]
    %v32 = vld [vmem:[%s1 + $0x18] sm:$0xff]
    %v33 = vld [vmem:[%s2] sm:$0xff]
    %v34 = vld [vmem:[%s2 + $0x8] sm:$0xff]
    %v35 = vld [vmem:[%s2 + $0x10] sm:$0xff]
    %v36 = vld [vmem:[%s2 + $0x18] sm:$0xff]
    %v37 = vld [vmem:[#allocation2] sm:$0xff]
    %v38 = vld [vmem:[#allocation2 + $0x8] sm:$0xff]
    %v39 = vld [vmem:[#allocation2 + $0x10] sm:$0xff]
    %v40 = vld [vmem:[#allocation2 + $0x18] sm:$0xff]
    %v41 = vld [vmem:[#allocation2 + $0x20] sm:$0xff]
    %v42 = vld [vmem:[#allocation2 + $0x28] sm:$0xff]
    %v43 = vld [vmem:[#allocation2 + $0x30] sm:$0xff]
    %v44 = vld [vmem:[#allocation2 + $0x38] sm:$0xff]
    %v45 = vadd.f32 %v37, %v38
    %46 = vadd.xlane.f32.xlu0 %v45
    %v47 = vpop.xlane.xlu0 %46
    %v48 = vadd.f32 %v39, %v40
    %49 = vadd.xlane.f32.xlu0 %v48
    %v50 = vpop.xlane.xlu0 %49
    %v51 = vadd.f32 %v41, %v42
    %52 = vadd.xlane.f32.xlu0 %v51
    %v53 = vpop.xlane.xlu0 %52
    %v54 = vadd.f32 %v43, %v44
    %55 = vadd.xlane.f32.xlu0 %v54
    %v56 = vpop.xlane.xlu0 %55
    %v57 = vmul.f32 %v47, 0.00390625
    %v58 = vmul.f32 %v50, 0.00390625
    %v59 = vmul.f32 %v53, 0.00390625
    %v60 = vmul.f32 %v56, 0.00390625
    %v61 = vmul.f32 %v57, %v29
    %v62 = vmul.f32 %v58, %v30
    %v63 = vmul.f32 %v59, %v31
    %v64 = vmul.f32 %v60, %v32
    %vm65 = vcmask 15360
    %v66 = vsel %vm65, %v61, 0.0
    %v67 = vsel %vm65, %v62, 0.0
    %v68 = vadd.f32 %v66, %v67
    %v69 = vsel %vm65, %v63, 0.0
    %v70 = vadd.f32 %v68, %v69
    %v71 = vsel %vm65, %v64, 0.0
    %v72 = vadd.f32 %v70, %v71
    %v73 = vrot.slane %v72, 4
    %v74 = vadd.f32 %v72, %v73
    %v75 = vrot.slane %v74, 2
    %v76 = vadd.f32 %v74, %v75
    %v77 = vrot.slane %v76, 1
    %v78 = vadd.f32 %v76, %v77
    %v79 = vmax.f32 %v78, 0.0
    %v80 = vmul.f32 %v79, %v33
    %v81 = vmul.f32 %v79, %v34
    %v82 = vmul.f32 %v79, %v35
    %v83 = vmul.f32 %v79, %v36
    %v84 = vsel %vm65, %v80, 0.0
    %85 = vadd.xlane.f32.xlu0 %v84
    %v86 = vpop.xlane.xlu0 %85
    %v87 = vsel %vm65, %v81, 0.0
    %88 = vadd.xlane.f32.xlu0 %v87
    %v89 = vpop.xlane.xlu0 %88
    %v90 = vsel %vm65, %v82, 0.0
    %91 = vadd.xlane.f32.xlu0 %v90
    %v92 = vpop.xlane.xlu0 %91
    %v93 = vsel %vm65, %v83, 0.0
    %94 = vadd.xlane.f32.xlu0 %v93
    %v95 = vpop.xlane.xlu0 %94
    %v96 = vsub.f32 0.0, %v86
    %v97 = vsub.f32 0.0, %v89
    %v98 = vsub.f32 0.0, %v92
    %v99 = vsub.f32 0.0, %v95
    %v100 = vmul.f32 %v96, 1.442695
    %v101 = vpow.pop %v100
    %v102 = vmul.f32 %v97, 1.442695
    %v103 = vpow.pop %v102
    %v104 = vmul.f32 %v98, 1.442695
    %v105 = vpow.pop %v104
    %v106 = vmul.f32 %v99, 1.442695
    %v107 = vpow.pop %v106
    %v108 = vadd.f32 %v101, 1.0
    %v109 = vadd.f32 %v103, 1.0
    %v110 = vadd.f32 %v105, 1.0
    %v111 = vadd.f32 %v107, 1.0
    %v112 = vrcp.pop %v108
    %v113 = vmul.f32 1.0, %v112
    %v114 = vrcp.pop %v109
    %v115 = vmul.f32 1.0, %v114
    %v116 = vrcp.pop %v110
    %v117 = vmul.f32 1.0, %v116
    %v118 = vrcp.pop %v111
    %v119 = vmul.f32 1.0, %v118
    %v120 = vmul.f32 %v37, %v113
    %v121 = vmul.f32 %v38, %v113
    %v122 = vmul.f32 %v39, %v115
    %v123 = vmul.f32 %v40, %v115
    %v124 = vmul.f32 %v41, %v117
    %v125 = vmul.f32 %v42, %v117
    %v126 = vmul.f32 %v43, %v119
    %v127 = vmul.f32 %v44, %v119
    %128 = vst [vmem:[#allocation5] sm:$0xff] %v120
    %129 = vst [vmem:[#allocation5 + $0x8] sm:$0xff] %v121
    %130 = vst [vmem:[#allocation5 + $0x10] sm:$0xff] %v122
    %131 = vst [vmem:[#allocation5 + $0x18] sm:$0xff] %v123
    %132 = vst [vmem:[#allocation5 + $0x20] sm:$0xff] %v124
    %133 = vst [vmem:[#allocation5 + $0x28] sm:$0xff] %v125
    %134 = vst [vmem:[#allocation5 + $0x30] sm:$0xff] %v126
    %135 = vst [vmem:[#allocation5 + $0x38] sm:$0xff] %v127
    %s136 = scalar_lea.vmem [#allocation2], 64
    %v137 = vld [vmem:[%s136] sm:$0xff]
    %v138 = vld [vmem:[%s136 + $0x8] sm:$0xff]
    %v139 = vld [vmem:[%s136 + $0x10] sm:$0xff]
    %v140 = vld [vmem:[%s136 + $0x18] sm:$0xff]
    %v141 = vld [vmem:[%s136 + $0x20] sm:$0xff]
    %v142 = vld [vmem:[%s136 + $0x28] sm:$0xff]
    %v143 = vld [vmem:[%s136 + $0x30] sm:$0xff]
    %v144 = vld [vmem:[%s136 + $0x38] sm:$0xff]
    %v145 = vadd.f32 %v137, %v138
    %146 = vadd.xlane.f32.xlu0 %v145
    %v147 = vpop.xlane.xlu0 %146
    %v148 = vadd.f32 %v139, %v140
    %149 = vadd.xlane.f32.xlu0 %v148
    %v150 = vpop.xlane.xlu0 %149
    %v151 = vadd.f32 %v141, %v142
    %152 = vadd.xlane.f32.xlu0 %v151
    %v153 = vpop.xlane.xlu0 %152
    %v154 = vadd.f32 %v143, %v144
    %155 = vadd.xlane.f32.xlu0 %v154
    %v156 = vpop.xlane.xlu0 %155
    %v157 = vmul.f32 %v147, 0.00390625
    %v158 = vmul.f32 %v150, 0.00390625
    %v159 = vmul.f32 %v153, 0.00390625
    %v160 = vmul.f32 %v156, 0.00390625
    %v161 = vmul.f32 %v157, %v29
    %v162 = vmul.f32 %v158, %v30
    %v163 = vmul.f32 %v159, %v31
    %v164 = vmul.f32 %v160, %v32
    %v165 = vsel %vm65, %v161, 0.0
    %v166 = vsel %vm65, %v162, 0.0
    %v167 = vadd.f32 %v165, %v166
    %v168 = vsel %vm65, %v163, 0.0
    %v169 = vadd.f32 %v167, %v168
    %v170 = vsel %vm65, %v164, 0.0
    %v171 = vadd.f32 %v169, %v170
    %v172 = vrot.slane %v171, 4
    %v173 = vadd.f32 %v171, %v172
    %v174 = vrot.slane %v173, 2
    %v175 = vadd.f32 %v173, %v174
    %v176 = vrot.slane %v175, 1
    %v177 = vadd.f32 %v175, %v176
    %v178 = vmax.f32 %v177, 0.0
    %v179 = vmul.f32 %v178, %v33
    %v180 = vmul.f32 %v178, %v34
    %v181 = vmul.f32 %v178, %v35
    %v182 = vmul.f32 %v178, %v36
    %v183 = vsel %vm65, %v179, 0.0
    %184 = vadd.xlane.f32.xlu0 %v183
    %v185 = vpop.xlane.xlu0 %184
    %v186 = vsel %vm65, %v180, 0.0
    %187 = vadd.xlane.f32.xlu0 %v186
    %v188 = vpop.xlane.xlu0 %187
    %v189 = vsel %vm65, %v181, 0.0
    %190 = vadd.xlane.f32.xlu0 %v189
    %v191 = vpop.xlane.xlu0 %190
    %v192 = vsel %vm65, %v182, 0.0
    %193 = vadd.xlane.f32.xlu0 %v192
    %v194 = vpop.xlane.xlu0 %193
    %v195 = vsub.f32 0.0, %v185
    %v196 = vsub.f32 0.0, %v188
    %v197 = vsub.f32 0.0, %v191
    %v198 = vsub.f32 0.0, %v194
    %v199 = vmul.f32 %v195, 1.442695
    %v200 = vpow.pop %v199
    %v201 = vmul.f32 %v196, 1.442695
    %v202 = vpow.pop %v201
    %v203 = vmul.f32 %v197, 1.442695
    %v204 = vpow.pop %v203
    %v205 = vmul.f32 %v198, 1.442695
    %v206 = vpow.pop %v205
    %v207 = vadd.f32 %v200, 1.0
    %v208 = vadd.f32 %v202, 1.0
    %v209 = vadd.f32 %v204, 1.0
    %v210 = vadd.f32 %v206, 1.0
    %v211 = vrcp.pop %v207
    %v212 = vmul.f32 1.0, %v211
    %v213 = vrcp.pop %v208
    %v214 = vmul.f32 1.0, %v213
    %v215 = vrcp.pop %v209
    %v216 = vmul.f32 1.0, %v215
    %v217 = vrcp.pop %v210
    %v218 = vmul.f32 1.0, %v217
    %v219 = vmul.f32 %v137, %v212
    %v220 = vmul.f32 %v138, %v212
    %v221 = vmul.f32 %v139, %v214
    %v222 = vmul.f32 %v140, %v214
    %v223 = vmul.f32 %v141, %v216
    %v224 = vmul.f32 %v142, %v216
    %v225 = vmul.f32 %v143, %v218
    %v226 = vmul.f32 %v144, %v218
    %s227 = scalar_lea.vmem [#allocation5], 64
    %228 = vst [vmem:[%s227] sm:$0xff] %v219
    %229 = vst [vmem:[%s227 + $0x8] sm:$0xff] %v220
    %230 = vst [vmem:[%s227 + $0x10] sm:$0xff] %v221
    %231 = vst [vmem:[%s227 + $0x18] sm:$0xff] %v222
    %232 = vst [vmem:[%s227 + $0x20] sm:$0xff] %v223
    %233 = vst [vmem:[%s227 + $0x28] sm:$0xff] %v224
    %234 = vst [vmem:[%s227 + $0x30] sm:$0xff] %v225
    %235 = vst [vmem:[%s227 + $0x38] sm:$0xff] %v226
    // Predicated region
    $region18: #{tpu_custom_call.1} parent=1 // pred_check
      _
    $region19: #{tpu_custom_call.1} parent=1 // pred_check_branch
      %237 = sbr.rel (0) target = $region21
    $region20: #{tpu_custom_call.1} parent=1 // pred_region
      %s239 = ssub.s32 2048, 2048
      %240 = vsyncadd [#allocation4], %s239
      %s241 = sshll.u32 [#allocation5], 4
      %s242 = int_to_ptr.vmem [resolvable:$true] %s241
      %247 = dma.vmem_to_hbm [thread:$0]  %s242, 2048, %s3, [#allocation4], 256, 256, 16
    $region21: #{tpu_custom_call.1} parent=1 // pred_fallthru
      _
    // Predicated region
    $region22: #{tpu_custom_call.1} parent=1 // pred_check
      _
    $region23: #{tpu_custom_call.1} parent=1 // pred_check_branch
      %249 = sbr.rel (0) target = $region25
    $region24: #{tpu_custom_call.1} parent=1 // pred_region
      %250 = dma.done [#allocation4], 2048
    $region25: #{tpu_custom_call.1} parent=1 // pred_fallthru
      _
    %251 = vsyncpa [#allocation3], 1
    %252 = vsyncpa [#allocation4], 1

</llo_original>
